<compile_context>
chip_gen: v7x
topology: tpu7x:2x2x1
jax: 0.10.0
libtpu: 0.0.40
codegen_flags: <defaults>
</compile_context>

<pallas_src>
import jax
import jax.numpy as jnp
import numpy as np
from jax import lax
from jax.experimental import pallas as pl
from jax.experimental.pallas import tpu as pltpu


def _patch_embed_kernel(xp_ref, w_ref, b_ref, o_ref):
    # xp_ref: (tm, Kp) flattened patches (compute dtype)
    # w_ref : (Kp, Ep) reshaped conv weight (compute dtype, stationary)
    # b_ref : (1, Ep)  bias (f32, stationary)
    # o_ref : (tm, Ep) output tile
    acc = jnp.dot(xp_ref[...], w_ref[...], preferred_element_type=jnp.float32)
    o_ref[...] = (acc + b_ref[...].astype(jnp.float32)).astype(o_ref.dtype)


def _round_up(x, m):
    return ((x + m - 1) // m) * m


def _choose_tm(M, Kp, Ep, in_bytes, out_bytes, sub_align, vmem_budget=40 << 20):
    """Largest tm <= 1024 (multiple of sub_align) whose double-buffered
    footprint fits the VMEM budget."""
    tm = min(1024, _round_up(M, sub_align))

    def footprint(t):
        return 2 * (t * Kp * in_bytes      # xp tile (double-buffered)
                    + Kp * Ep * in_bytes   # stationary weight
                    + Ep * 4               # stationary bias (f32)
                    + t * Ep * out_bytes)  # output tile

    while tm > sub_align and footprint(tm) > vmem_budget:
        tm = max(sub_align, (tm // 2 // sub_align) * sub_align)
    return tm, footprint(tm)


def patch_embed_forward(x, w, b, patch_size, *, compute_dtype=jnp.bfloat16,
                        out_dtype=None):
    """x: (B, C, H, W); w: (embed_dim, C, P, P) PyTorch OIHW conv weight;
    b: (embed_dim,).  Returns (B, num_patches, embed_dim)."""
    B, C, H, W = x.shape
    P = patch_size
    assert H % P == 0 and W % P == 0, "image size must be a multiple of patch size"
    nH, nW = H // P, W // P
    num_patches = nH * nW
    E = w.shape[0]
    K = C * P * P
    M = B * num_patches
    out_dtype = out_dtype or x.dtype

    # ---- layout plumbing in the wrapper (no compute) -----------------------
    # (B, C, nH, P, nW, P) -> (B, nH, nW, C, P, P) -> (B*num_patches, C*P*P)
    # TODO(synk): this standalone transpose is one extra HBM pass over x; for
    # very large inputs consider allow_input_fusion or in-kernel patchification.
    xp = x.reshape(B, C, nH, P, nW, P).transpose(0, 2, 4, 1, 3, 5).reshape(M, K)
    wt = jnp.asarray(w).reshape(E, K).T          # (K, E): hot path is xp @ W
    b2 = jnp.asarray(b).reshape(1, E).astype(jnp.float32)

    # bf16 compute path (MXU-native); accumulation stays f32 in the kernel.
    xp = xp.astype(compute_dtype)
    wt = wt.astype(compute_dtype)

    in_bytes = np.dtype(compute_dtype).itemsize
    out_bytes = np.dtype(out_dtype).itemsize
    sub_align = 8 * max(1, 4 // in_bytes)        # 8 for f32, 16 for bf16, 32 for int8

    # Pad K to a lane multiple: zero rows/cols contribute 0 to the dot.
    Kp = _round_up(K, 128)
    if Kp != K:
        xp = jnp.pad(xp, ((0, 0), (0, Kp - K)))
        wt = jnp.pad(wt, ((0, Kp - K), (0, 0)))

    # Pad E so the output store is lane-dense (unmasked vst).
    Ep = _round_up(E, 128)
    if Ep != E:
        wt = jnp.pad(wt, ((0, 0), (0, Ep - E)))
        b2 = jnp.pad(b2, ((0, 0), (0, Ep - E)))

    # Pick tm, then pad M so the grid divides evenly (no giant fallback tile).
    tm, footprint = _choose_tm(M, Kp, Ep, in_bytes, out_bytes, sub_align)
    Mp = _round_up(M, tm)
    if Mp != M:
        xp = jnp.pad(xp, ((0, Mp - M), (0, 0)))

    # VMEM limit sized to the real footprint + margin, capped below v7x's 64 MiB.
    vmem_limit = int(min(footprint + (8 << 20), 48 << 20))

    out = pl.pallas_call(
        _patch_embed_kernel,
        out_shape=jax.ShapeDtypeStruct((Mp, Ep), out_dtype),
        grid_spec=pltpu.PrefetchScalarGridSpec(
            num_scalar_prefetch=0,
            grid=(Mp // tm,),
            in_specs=[
                pl.BlockSpec((tm, Kp), lambda i: (i, 0)),   # streamed patches
                pl.BlockSpec((Kp, Ep), lambda i: (0, 0)),   # stationary weight
                pl.BlockSpec((1, Ep), lambda i: (0, 0)),    # stationary bias
            ],
            out_specs=pl.BlockSpec((tm, Ep), lambda i: (i, 0)),
        ),
        compiler_params=pltpu.CompilerParams(
            dimension_semantics=("parallel",),
            vmem_limit_bytes=vmem_limit,
        ),
    )(xp, wt, b2)

    return out[:M, :E].reshape(B, num_patches, E)


def patch_embed_reference(x, w, b, patch_size, compute_dtype=jnp.bfloat16):
    """Plain-JAX replica of the PyTorch forward (Conv2d -> flatten -> transpose),
    with the same bf16 input rounding as the kernel's compute path."""
    xq = x.astype(compute_dtype).astype(jnp.float32)
    wq = w.astype(compute_dtype).astype(jnp.float32)
    out = lax.conv_general_dilated(
        xq, wq,
        window_strides=(patch_size, patch_size),
        padding="VALID",
        dimension_numbers=("NCHW", "OIHW", "NCHW"),
        precision=lax.Precision.HIGHEST,
    )
    out = out + b.reshape(1, -1, 1, 1).astype(jnp.float32)
    B, E, nH, nW = out.shape
    return out.reshape(B, E, nH * nW).transpose(0, 2, 1)


if __name__ == "__main__":
    # Small shapes consistent with the module (defaults scaled down):
    # batch=2, in_chans=3, img_size=32, patch_size=8 -> num_patches=16,
    # embed_dim=128.
    B, C, IMG, P, E = 2, 3, 32, 8, 128

    key = jax.random.PRNGKey(0)
    kx, kw, kb = jax.random.split(key, 3)

    x = jax.random.normal(kx, (B, C, IMG, IMG), dtype=jnp.float32)
    w = 0.02 * jax.random.truncated_normal(kw, -2.0, 2.0, (E, C, P, P), jnp.float32)
    b = 0.02 * jax.random.normal(kb, (E,), dtype=jnp.float32)

    out = patch_embed_forward(x, w, b, P)
    out = jax.block_until_ready(out)
    assert out.shape == (B, (IMG // P) * (IMG // P), E)

    ref = patch_embed_reference(x, w, b, P)
    np.testing.assert_allclose(np.asarray(out, dtype=np.float32),
                               np.asarray(ref, dtype=np.float32),
                               atol=1e-2, rtol=1e-2)

    print("KERNEL_OK")
</pallas_src>

<mosaic_0001>
module attributes {stable_mosaic.version = 11 : i64} {
  func.func @_patch_embed_kernel(%arg0: i32, %arg1: memref<32x256xbf16, #tpu.memory_space<vmem>>, %arg2: memref<256x128xbf16, #tpu.memory_space<vmem>>, %arg3: memref<1x128xf32, #tpu.memory_space<vmem>>, %arg4: memref<32x128xf32, #tpu.memory_space<vmem>>) attributes {dimension_semantics = [#tpu.dimension_semantics<parallel>], iteration_bounds = array<i64: 1>, scalar_prefetch = 0 : i64, scratch_operands = 0 : i64, tpu.core_type = #tpu.core_type<tc>, window_params = [{transform_indices = @transform_0, window_bounds = array<i64: 32, 256>}, {pipeline_mode = #tpu.pipeline_mode<synchronous>, transform_indices = @transform_1, window_bounds = array<i64: 256, 128>}, {pipeline_mode = #tpu.pipeline_mode<synchronous>, transform_indices = @transform_2, window_bounds = array<i64: 1, 128>}, {transform_indices = @transform_3, window_bounds = array<i64: 32, 128>}]} {
    %c0 = arith.constant 0 : index
    %c0_0 = arith.constant 0 : index
    %0 = vector.load %arg1[%c0, %c0_0] : memref<32x256xbf16, #tpu.memory_space<vmem>>, vector<32x256xbf16>
    %c0_1 = arith.constant 0 : index
    %c0_2 = arith.constant 0 : index
    %1 = vector.load %arg2[%c0_1, %c0_2] : memref<256x128xbf16, #tpu.memory_space<vmem>>, vector<256x128xbf16>
    %cst = arith.constant dense<0.000000e+00> : vector<32x128xf32>
    %2 = tpu.matmul %0, %1, %cst {dimension_numbers = #tpu.dot_dimension_numbers<[1], [0], [0], [1], [0, 0, 1, 1], [], []>} : vector<32x256xbf16>, vector<256x128xbf16>, vector<32x128xf32> -> vector<32x128xf32>
    %c0_3 = arith.constant 0 : index
    %c0_4 = arith.constant 0 : index
    %3 = vector.load %arg3[%c0_3, %c0_4] : memref<1x128xf32, #tpu.memory_space<vmem>>, vector<1x128xf32>
    %4 = vector.broadcast %3 : vector<1x128xf32> to vector<32x128xf32>
    %5 = arith.addf %2, %4 : vector<32x128xf32>
    %c0_5 = arith.constant 0 : index
    %c0_6 = arith.constant 0 : index
    %6 = vector.load %arg4[%c0_5, %c0_6] : memref<32x128xf32, #tpu.memory_space<vmem>>, vector<32x128xf32>
    tpu.vector_store %arg4[%c0_5, %c0_6], %5 {strides = array<i32>} : memref<32x128xf32, #tpu.memory_space<vmem>>, vector<32x128xf32>,
    return
  }
  func.func @transform_0(%arg0: i32) -> (i32, i32) {
    %c0_i32 = arith.constant 0 : i32
    %c0_i32_0 = arith.constant 0 : i32
    return %arg0, %c0_i32 : i32, i32
  }
  func.func @transform_1(%arg0: i32) -> (i32, i32) {
    %c0_i32 = arith.constant 0 : i32
    %c0_i32_0 = arith.constant 0 : i32
    %c0_i32_1 = arith.constant 0 : i32
    return %c0_i32, %c0_i32_0 : i32, i32
  }
  func.func @transform_2(%arg0: i32) -> (i32, i32) {
    %c0_i32 = arith.constant 0 : i32
    %c0_i32_0 = arith.constant 0 : i32
    %c0_i32_1 = arith.constant 0 : i32
    return %c0_i32, %c0_i32_0 : i32, i32
  }
  func.func @transform_3(%arg0: i32) -> (i32, i32) {
    %c0_i32 = arith.constant 0 : i32
    %c0_i32_0 = arith.constant 0 : i32
    return %arg0, %c0_i32 : i32, i32
  }
}

</mosaic_0001>

<llo_original>
// kernel: tpu_custom_call.1
$region0: #{tpu_custom_call.1}
  #allocation0 [shape = 'u32[]', space=smem, size = 0x4, offset = 0x4, fixed_abs, tag = 'smem constant byte address 0x4 - core index']
  #allocation1 [shape = 'u32[144,128]{1,0:T(1,128)}', space=vmem, size = 0x12000, scoped, tag = 'internal scratch']
  %s0 = inlined_call_operand.hbm [shape: bf16[32,256], index: 0, kind: input, shape index: {}]
  %s1 = inlined_call_operand.hbm [shape: bf16[256,128], index: 1, kind: input, shape index: {}]
  %s2 = inlined_call_operand.vmem [shape: f32[1,128], index: 2, kind: input, shape index: {}]
  %s3 = inlined_call_operand.hbm [shape: f32[32,128], index: 3, kind: output, shape index: {}]
  %s4 = sld [smem:[#allocation0]]
  $region30: #{tpu_custom_call.1} parent=0
    _
  %s6 = ssub.s32 1, %s4
  %s7 = scalar_select 0, %s6, %s4
  $region1: #{tpu_custom_call.1} parent=0
    #allocation2 [shape = 'u8[16384]{0}', space=vmem, size = 0x4000, scoped, tag = 'input window, operand 0, single buffered']
    #allocation3 [shape = 's32[1]{0}', space=sflag, size = 0x4, scoped, tag = 'scoped memory for tpu_custom_call.1']
    #allocation4 [shape = 's32[1]{0}', space=sflag, size = 0x4, scoped, tag = 'scoped memory for tpu_custom_call.1']
    #allocation5 [shape = 'u8[65536]{0}', space=vmem, size = 0x10000, scoped, tag = 'input window, operand 1, single buffered']
    #allocation6 [shape = 's32[1]{0}', space=sflag, size = 0x4, scoped, tag = 'scoped memory for tpu_custom_call.1']
    #allocation7 [shape = 'u8[16384]{0}', space=vmem, size = 0x4000, scoped, tag = 'output window, operand 0, single buffered']
    %8 = vsyncpa [#allocation3], 0
    %9 = vsyncpa [#allocation6], 0
    %10 = vsyncpa [#allocation4], 0
    // Predicated region
    $region2: #{tpu_custom_call.1} parent=1 // pred_check
      _
    $region3: #{tpu_custom_call.1} parent=1 // pred_check_branch
      %12 = sbr.rel (0) target = $region5
    $region4: #{tpu_custom_call.1} parent=1 // pred_region
      %s14 = ssub.s32 512, 512
      %15 = vsyncadd [#allocation3], %s14
      %s16 = sshll.u32 [#allocation2], 4
      %s17 = int_to_ptr.vmem [resolvable:$true] %s16
      %22 = dma.hbm_to_vmem [thread:$0]  %s0, 512, %s17, [#allocation3], 128, 128, 8
    $region5: #{tpu_custom_call.1} parent=1 // pred_fallthru
      _
    // Predicated region
    $region6: #{tpu_custom_call.1} parent=1 // pred_check
      _
    $region7: #{tpu_custom_call.1} parent=1 // pred_check_branch
      %24 = sbr.rel (0) target = $region9
    $region8: #{tpu_custom_call.1} parent=1 // pred_region
      %s26 = ssub.s32 2048, 2048
      %27 = vsyncadd [#allocation6], %s26
      %s28 = sshll.u32 [#allocation5], 4
      %s29 = int_to_ptr.vmem [resolvable:$true] %s28
      %34 = dma.hbm_to_vmem [thread:$0]  %s1, 2048, %s29, [#allocation6], 64, 64, 4
    $region9: #{tpu_custom_call.1} parent=1 // pred_fallthru
      _
    // Predicated region
    $region10: #{tpu_custom_call.1} parent=1 // pred_check
      _
    $region11: #{tpu_custom_call.1} parent=1 // pred_check_branch
      %36 = sbr.rel (0) target = $region13
    $region12: #{tpu_custom_call.1} parent=1 // pred_region
      _
    $region13: #{tpu_custom_call.1} parent=1 // pred_fallthru
      _
    // Predicated region
    $region14: #{tpu_custom_call.1} parent=1 // pred_check
      _
    $region15: #{tpu_custom_call.1} parent=1 // pred_check_branch
      %38 = sbr.rel (0) target = $region17
    $region16: #{tpu_custom_call.1} parent=1 // pred_region
      %39 = dma.done [#allocation3], 512
    $region17: #{tpu_custom_call.1} parent=1 // pred_fallthru
      _
    // Predicated region
    $region18: #{tpu_custom_call.1} parent=1 // pred_check
      _
    $region19: #{tpu_custom_call.1} parent=1 // pred_check_branch
      %41 = sbr.rel (0) target = $region21
    $region20: #{tpu_custom_call.1} parent=1 // pred_region
      %42 = dma.done [#allocation6], 2048
    $region21: #{tpu_custom_call.1} parent=1 // pred_fallthru
      _
    %v44 = vld [vmem:[#allocation2] sm:$0xff]
    %v45 = vld [vmem:[#allocation2 + $0x8] sm:$0xff]
    %v46 = vld [vmem:[#allocation2 + $0x10] sm:$0xff]
    %v47 = vld [vmem:[#allocation2 + $0x18] sm:$0xff]
    %v48 = vld [vmem:[#allocation5] sm:$0xf]
    %v49 = vld [vmem:[#allocation5 + $0x4] sm:$0xf]
    %v50 = vld [vmem:[#allocation5 + $0x8] sm:$0xf]
    %v51 = vld [vmem:[#allocation5 + $0xc] sm:$0xf]
    %v52 = vld [vmem:[#allocation5 + $0x10] sm:$0xf]
    %v53 = vld [vmem:[#allocation5 + $0x14] sm:$0xf]
    %v54 = vld [vmem:[#allocation5 + $0x18] sm:$0xf]
    %v55 = vld [vmem:[#allocation5 + $0x1c] sm:$0xf]
    %v56 = vld [vmem:[#allocation5 + $0x20] sm:$0xf]
    %v57 = vld [vmem:[#allocation5 + $0x24] sm:$0xf]
    %v58 = vld [vmem:[#allocation5 + $0x28] sm:$0xf]
    %v59 = vld [vmem:[#allocation5 + $0x2c] sm:$0xf]
    %v60 = vld [vmem:[#allocation5 + $0x30] sm:$0xf]
    %v61 = vld [vmem:[#allocation5 + $0x34] sm:$0xf]
    %v62 = vld [vmem:[#allocation5 + $0x38] sm:$0xf]
    %v63 = vld [vmem:[#allocation5 + $0x3c] sm:$0xf]
    %v64 = vld [vmem:[#allocation5 + $0x40] sm:$0xf]
    %v65 = vld [vmem:[#allocation5 + $0x44] sm:$0xf]
    %v66 = vld [vmem:[#allocation5 + $0x48] sm:$0xf]
    %v67 = vld [vmem:[#allocation5 + $0x4c] sm:$0xf]
    %v68 = vld [vmem:[#allocation5 + $0x50] sm:$0xf]
    %v69 = vld [vmem:[#allocation5 + $0x54] sm:$0xf]
    %v70 = vld [vmem:[#allocation5 + $0x58] sm:$0xf]
    %v71 = vld [vmem:[#allocation5 + $0x5c] sm:$0xf]
    %v72 = vld [vmem:[#allocation5 + $0x60] sm:$0xf]
    %v73 = vld [vmem:[#allocation5 + $0x64] sm:$0xf]
    %v74 = vld [vmem:[#allocation5 + $0x68] sm:$0xf]
    %v75 = vld [vmem:[#allocation5 + $0x6c] sm:$0xf]
    %v76 = vld [vmem:[#allocation5 + $0x70] sm:$0xf]
    %v77 = vld [vmem:[#allocation5 + $0x74] sm:$0xf]
    %v78 = vld [vmem:[#allocation5 + $0x78] sm:$0xf]
    %v79 = vld [vmem:[#allocation5 + $0x7c] sm:$0xf]
    %v80 = vld [vmem:[%s2] sm:$0x1]
    %v82 = vlaneseq
    %v83 = vshrl.u32 %v82, 7
    %v84 = vsub.s32 0, %v83
    %v85 = vrot.slane %v80, %v84
    %v91 = vunpack.c.l.b16 %v44
    %v92 = vunpack.c.h.b16 %v44
    %v93 = vunpack.c.l.b16 %v45
    %v94 = vunpack.c.h.b16 %v45
    %v95 = vunpack.c.l.b16 %v46
    %v96 = vunpack.c.h.b16 %v46
    %v97 = vunpack.c.l.b16 %v47
    %v98 = vunpack.c.h.b16 %v47
    %v99 = vpack.c.b16 %v93, %v91
    %v100 = vpack.c.b16 %v94, %v92
    %v101 = vpack.c.b16 %v97, %v95
    %v102 = vpack.c.b16 %v98, %v96
    %v139 = vunpack.c.l.b16 %v48
    %v140 = vunpack.c.l.b16 %v49
    %v141 = vunpack.c.l.b16 %v50
    %v142 = vunpack.c.l.b16 %v51
    %v143 = vunpack.c.l.b16 %v52
    %v144 = vunpack.c.l.b16 %v53
    %v145 = vunpack.c.l.b16 %v54
    %v146 = vunpack.c.l.b16 %v55
    %v147 = vunpack.c.l.b16 %v56
    %v148 = vunpack.c.l.b16 %v57
    %v149 = vunpack.c.l.b16 %v58
    %v150 = vunpack.c.l.b16 %v59
    %v151 = vunpack.c.l.b16 %v60
    %v152 = vunpack.c.l.b16 %v61
    %v153 = vunpack.c.l.b16 %v62
    %v154 = vunpack.c.l.b16 %v63
    %v155 = vunpack.c.l.b16 %v64
    %v156 = vunpack.c.l.b16 %v65
    %v157 = vunpack.c.l.b16 %v66
    %v158 = vunpack.c.l.b16 %v67
    %v159 = vunpack.c.l.b16 %v68
    %v160 = vunpack.c.l.b16 %v69
    %v161 = vunpack.c.l.b16 %v70
    %v162 = vunpack.c.l.b16 %v71
    %v163 = vunpack.c.l.b16 %v72
    %v164 = vunpack.c.l.b16 %v73
    %v165 = vunpack.c.l.b16 %v74
    %v166 = vunpack.c.l.b16 %v75
    %v167 = vunpack.c.l.b16 %v76
    %v168 = vunpack.c.l.b16 %v77
    %v169 = vunpack.c.l.b16 %v78
    %v170 = vunpack.c.l.b16 %v79
    %v171 = vpack.c.b16 %v140, %v139
    %v172 = vpack.c.b16 %v142, %v141
    %v173 = vpack.c.b16 %v144, %v143
    %v174 = vpack.c.b16 %v146, %v145
    %v175 = vpack.c.b16 %v148, %v147
    %v176 = vpack.c.b16 %v150, %v149
    %v177 = vpack.c.b16 %v152, %v151
    %v178 = vpack.c.b16 %v154, %v153
    %v179 = vpack.c.b16 %v156, %v155
    %v180 = vpack.c.b16 %v158, %v157
    %v181 = vpack.c.b16 %v160, %v159
    %v182 = vpack.c.b16 %v162, %v161
    %v183 = vpack.c.b16 %v164, %v163
    %v184 = vpack.c.b16 %v166, %v165
    %v185 = vpack.c.b16 %v168, %v167
    %v186 = vpack.c.b16 %v170, %v169
    %203 = vmatprep.subr.bf16.mxu0 0
    %204 = vmatpush1.bf16.msra.mxu0 %v171
    %205 = vmatprep.subr.bf16.mxu0 0
    %206 = vmatpush1.bf16.msra.mxu0 %v172
    %207 = vmatprep.subr.bf16.mxu0 0
    %208 = vmatpush1.bf16.msra.mxu0 %v173
    %209 = vmatprep.subr.bf16.mxu0 0
    %210 = vmatpush1.bf16.msra.mxu0 %v174
    %211 = vmatprep.subr.bf16.mxu0 0
    %212 = vmatpush1.bf16.msra.mxu0 %v175
    %213 = vmatprep.subr.bf16.mxu0 0
    %214 = vmatpush1.bf16.msra.mxu0 %v176
    %215 = vmatprep.subr.bf16.mxu0 0
    %216 = vmatpush1.bf16.msra.mxu0 %v177
    %217 = vmatprep.subr.bf16.mxu0 0
    %218 = vmatpush1.bf16.msra.mxu0 %v178
    %219 = vmatprep.subr.bf16.mxu0 0
    %220 = vmatpush1.bf16.msra.mxu0 %v179
    %221 = vmatprep.subr.bf16.mxu0 0
    %222 = vmatpush1.bf16.msra.mxu0 %v180
    %223 = vmatprep.subr.bf16.mxu0 0
    %224 = vmatpush1.bf16.msra.mxu0 %v181
    %225 = vmatprep.subr.bf16.mxu0 0
    %226 = vmatpush1.bf16.msra.mxu0 %v182
    %227 = vmatprep.subr.bf16.mxu0 0
    %228 = vmatpush1.bf16.msra.mxu0 %v183
    %229 = vmatprep.subr.bf16.mxu0 0
    %230 = vmatpush1.bf16.msra.mxu0 %v184
    %231 = vmatprep.subr.bf16.mxu0 0
    %232 = vmatpush1.bf16.msra.mxu0 %v185
    %233 = vmatprep.subr.bf16.mxu0 0
    %234 = vmatpush1.bf16.msra.mxu0 %v186
    %235 = vmatprep.mubr.bf16.mxu0 %v100
    %236 = vmatmul.mubr.bf16.gmra.mrb[0].mxu0 %v99
    %v237 = vpop.f32.mrb[0].mxu0
    %v238 = vadd.f32 %v85, %v237
    %v239 = vpop.f32.mrb[0].mxu0
    %v240 = vpop.f32.mrb[0].mxu0
    %v241 = vadd.f32 %v85, %v240
    %v242 = vpop.f32.mrb[0].mxu0
    %243 = vmatprep.mubr.bf16.mxu0 %v102
    %244 = vmatmul.mubr.bf16.gmra.mrb[0].mxu0 %v101
    %v245 = vpop.f32.mrb[0].mxu0
    %v246 = vadd.f32 %v85, %v245
    %v247 = vpop.f32.mrb[0].mxu0
    %v248 = vpop.f32.mrb[0].mxu0
    %v249 = vadd.f32 %v85, %v248
    %v250 = vpop.f32.mrb[0].mxu0
    %251 = vdwg.mxu0
    %252 = vst [vmem:[#allocation7] sm:$0xff] %v238
    %253 = vst [vmem:[#allocation7 + $0x8] sm:$0xff] %v241
    %254 = vst [vmem:[#allocation7 + $0x10] sm:$0xff] %v246
    %255 = vst [vmem:[#allocation7 + $0x18] sm:$0xff] %v249
    // Predicated region
    $region22: #{tpu_custom_call.1} parent=1 // pred_check
      _
    $region23: #{tpu_custom_call.1} parent=1 // pred_check_branch
      %257 = sbr.rel (0) target = $region25
    $region24: #{tpu_custom_call.1} parent=1 // pred_region
      %s259 = ssub.s32 512, 512
      %260 = vsyncadd [#allocation4], %s259
      %s261 = sshll.u32 [#allocation7], 4
      %s262 = int_to_ptr.vmem [resolvable:$true] %s261
      %267 = dma.vmem_to_hbm [thread:$0]  %s262, 512, %s3, [#allocation4], 128, 128, 8
    $region25: #{tpu_custom_call.1} parent=1 // pred_fallthru
      _
    // Predicated region
    $region26: #{tpu_custom_call.1} parent=1 // pred_check
      _
    $region27: #{tpu_custom_call.1} parent=1 // pred_check_branch
      %269 = sbr.rel (0) target = $region29
    $region28: #{tpu_custom_call.1} parent=1 // pred_region
      %270 = dma.done [#allocation4], 512
    $region29: #{tpu_custom_call.1} parent=1 // pred_fallthru
      _
    %271 = vsyncpa [#allocation3], 1
    %272 = vsyncpa [#allocation6], 1
    %273 = vsyncpa [#allocation4], 1

</llo_original>
